<compile_context>
chip_gen: v7x
topology: tpu7x:2x2x1
jax: 0.10.0
libtpu: 0.0.40
codegen_flags: <defaults>
</compile_context>

<pallas_src>
import functools

import jax
import jax.numpy as jnp
from jax import lax
from jax.experimental import pallas as pl
from jax.experimental.pallas import tpu as pltpu


# ------------------------------- helpers -------------------------------------

def _round_up(x, m):
    return ((x + m - 1) // m) * m


def _choose_row_tile(n_rows, bytes_per_row, budget_bytes, max_tile=2048, granule=8):
    """Row tile: multiple of `granule`, fits `budget_bytes`, and leaves >=2 grid
    steps whenever the (granule-padded) problem spans >=2 granules, so that
    dimension_semantics=("parallel",) can shard across v7x's two TensorCores."""
    g = granule
    n_g = _round_up(max(int(n_rows), 1), g)
    t = (budget_bytes // max(1, bytes_per_row)) // g * g
    t = max(g, min(max_tile, t))
    if n_g >= 2 * g:
        t = min(t, max(g, (n_g // 2) // g * g))   # >= 2 grid steps (v7x megacore)
    else:
        t = min(t, n_g)
    return int(t)


def _vmem_limit(footprint_bytes):
    # v7x has only 64 MiB VMEM per TensorCore -> clamp the request to 48 MiB.
    return int(min(48 << 20, max(32 << 20, footprint_bytes + (4 << 20))))


# ---------------- fused kernel: in-kernel gather from resident tables --------

def _transe_fused_kernel(h_idx_ref, r_idx_ref, t_idx_ref,   # scalar prefetch (SMEM)
                         ent_ref, rel_ref,                   # resident VMEM tables
                         out_ref,                            # (tile_b, 1) distances
                         d_buf,                              # VMEM scratch (tile_b, dim)
                         *, norm_p, tile_b):
    """Fused gather + (h + r - t) + L_p reduction for one tile of rows."""
    base = pl.program_id(0) * tile_b

    def gather_row(j, carry):
        hi = h_idx_ref[base + j]
        ri = r_idx_ref[base + j]
        ti = t_idx_ref[base + j]
        d_buf[pl.ds(j, 1), :] = (ent_ref[pl.ds(hi, 1), :]
                                 + rel_ref[pl.ds(ri, 1), :]
                                 - ent_ref[pl.ds(ti, 1), :])
        return carry

    lax.fori_loop(0, tile_b, gather_row, 0)

    d = d_buf[...]
    if norm_p == 1:
        dist = jnp.sum(jnp.abs(d), axis=1, keepdims=True)
    elif norm_p == 2:
        dist = jnp.sqrt(jnp.sum(d * d, axis=1, keepdims=True))
    else:
        p = float(norm_p)
        dist = jnp.sum(jnp.abs(d) ** p, axis=1, keepdims=True) ** (1.0 / p)
    out_ref[...] = dist


def _transe_fused_pallas(h_idx, r_idx, t_idx, ent, rel, norm_p, tile_b):
    """h_idx/r_idx/t_idx: (n_pad,) int32; ent/rel: f32 tables. -> (n_pad, 1) f32."""
    n_pad = h_idx.shape[0]
    assert n_pad % tile_b == 0
    n_ent, dim = ent.shape
    n_rel, _ = rel.shape
    grid = (n_pad // tile_b,)

    footprint = (2 * 4 * (ent.size + rel.size)   # resident tables (x2 buffer margin)
                 + 4 * tile_b * dim              # d_buf scratch
                 + 2 * 4 * tile_b)               # double-buffered output column
    kernel = functools.partial(_transe_fused_kernel, norm_p=norm_p, tile_b=tile_b)

    return pl.pallas_call(
        kernel,
        out_shape=jax.ShapeDtypeStruct((n_pad, 1), jnp.float32),
        grid_spec=pltpu.PrefetchScalarGridSpec(
            num_scalar_prefetch=3,                      # h_idx, r_idx, t_idx -> SMEM
            grid=grid,
            in_specs=[
                # Whole tables; constant block index -> fetched once, resident
                # in VMEM across all grid steps (serves h, r and t lookups).
                pl.BlockSpec((n_ent, dim), lambda i, hi, ri, ti: (0, 0)),
                pl.BlockSpec((n_rel, dim), lambda i, hi, ri, ti: (0, 0)),
            ],
            out_specs=pl.BlockSpec((tile_b, 1), lambda i, hi, ri, ti: (i, 0)),
            scratch_shapes=[pltpu.VMEM((tile_b, dim), jnp.float32)],
        ),
        compiler_params=pltpu.CompilerParams(
            dimension_semantics=("parallel",),          # megacore sharding on v7x
            vmem_limit_bytes=_vmem_limit(footprint),
        ),
    )(h_idx, r_idx, t_idx, ent, rel)


# ------------- streaming kernel (fallback for HBM-sized tables) --------------

def _transe_stream_kernel(h_ref, r_ref, t_ref, out_ref, *, norm_p, pack):
    """L_p(h + r - t): h/r/t are (tile_r, pack*seg) bf16 tiles holding `pack`
    embeddings per 128-lane row; out is (tile_r, pack) f32 (lane-dense)."""
    h = h_ref[...].astype(jnp.float32)
    r = r_ref[...].astype(jnp.float32)
    t = t_ref[...].astype(jnp.float32)
    d = h + r - t
    w = d.shape[1]
    seg = w // pack
    # Block-diagonal ones (w, pack): segmented per-row reduction on the MXU,
    # keeping the XLU lane-reduce off the critical path (matters on v7x).
    lane = lax.broadcasted_iota(jnp.int32, (w, pack), 0)
    col = lax.broadcasted_iota(jnp.int32, (w, pack), 1)
    ones_blk = (lane // seg == col).astype(jnp.float32)
    if norm_p == 1:
        f = jnp.abs(d)
    elif norm_p == 2:
        f = d * d
    else:
        f = jnp.abs(d) ** float(norm_p)
    s = jnp.dot(f, ones_blk, preferred_element_type=jnp.float32)
    if norm_p == 2:
        s = jnp.sqrt(s)
    elif norm_p != 1:
        s = s ** (1.0 / float(norm_p))
    out_ref[...] = s


def _transe_stream_pallas(h, r, t, norm_p, pack, tile_r):
    npk_pad, w = h.shape
    assert npk_pad % tile_r == 0
    grid = (npk_pad // tile_r,)
    in_spec = pl.BlockSpec((tile_r, w), lambda i: (i, 0))
    out_spec = pl.BlockSpec((tile_r, pack), lambda i: (i, 0))
    footprint = (3 * 2 * tile_r * w * h.dtype.itemsize   # double-buffered inputs
                 + 2 * tile_r * pack * 4)                 # double-buffered output
    kernel = functools.partial(_transe_stream_kernel, norm_p=norm_p, pack=pack)
    return pl.pallas_call(
        kernel,
        out_shape=jax.ShapeDtypeStruct((npk_pad, pack), jnp.float32),
        grid_spec=pltpu.PrefetchScalarGridSpec(
            num_scalar_prefetch=0,
            grid=grid,
            in_specs=[in_spec, in_spec, in_spec],
            out_specs=out_spec,
        ),
        compiler_params=pltpu.CompilerParams(
            dimension_semantics=("parallel",),
            vmem_limit_bytes=_vmem_limit(footprint),
        ),
    )(h, r, t)


# ------------------------------- TransE model --------------------------------

_FUSED_TABLE_BUDGET = 24 << 20   # tables (x2 buffering margin) must fit this


class TransE:
    """JAX/Pallas re-implementation of the PyTorch TransE module's forward()."""

    def __init__(self, num_of_entities, num_of_relations,
                 entity_dimension, relation_dimension, margin, norm, key=None):
        assert entity_dimension == relation_dimension, (
            "forward() computes h + r - t; entity and relation dims must match")
        self.num_of_entities = num_of_entities
        self.num_of_relations = num_of_relations
        self.margin = margin          # unused in forward(), kept for parity
        self.norm = norm
        self.dim = entity_dimension

        if key is None:
            key = jax.random.PRNGKey(0)
        k_ent, k_rel = jax.random.split(key)
        # U[-6/sqrt(d), 6/sqrt(d)) then row-wise L2 normalization (as in torch).
        e_bound = 6.0 / (entity_dimension ** 0.5)
        r_bound = 6.0 / (relation_dimension ** 0.5)
        ent = jax.random.uniform(k_ent, (num_of_entities, entity_dimension),
                                 jnp.float32, minval=-e_bound, maxval=e_bound)
        rel = jax.random.uniform(k_rel, (num_of_relations, relation_dimension),
                                 jnp.float32, minval=-r_bound, maxval=r_bound)
        ent = ent / jnp.maximum(jnp.linalg.norm(ent, axis=1, keepdims=True), 1e-12)
        rel = rel / jnp.maximum(jnp.linalg.norm(rel, axis=1, keepdims=True), 1e-12)
        self.entity_embeddings = ent       # (E, dim) f32 "true" tables
        self.relation_embeddings = rel     # (R, dim)

        table_bytes = 4 * self.dim * (num_of_entities + num_of_relations)
        self._use_fused = (2 * table_bytes) <= _FUSED_TABLE_BUDGET
        self._stream_tables = None         # built lazily for the fallback path

    # -- fused path: tables resident in VMEM, gather done inside the kernel ---
    def _distances_fused(self, h_idx, r_idx, t_idx, n):
        tile_b = _choose_row_tile(n, bytes_per_row=4 * self.dim,
                                  budget_bytes=8 << 20, max_tile=1024)
        n_pad = _round_up(n, tile_b)
        if n_pad != n:
            pad = (0, n_pad - n)               # padded rows gather row 0, sliced off
            h_idx = jnp.pad(h_idx, pad)
            r_idx = jnp.pad(r_idx, pad)
            t_idx = jnp.pad(t_idx, pad)
        out = _transe_fused_pallas(h_idx, r_idx, t_idx,
                                   self.entity_embeddings, self.relation_embeddings,
                                   self.norm, tile_b)
        return out[:n, 0]

    # -- streaming path: for tables too large to keep resident in VMEM --------
    def _ensure_stream_tables(self):
        if self._stream_tables is not None:
            return
        dim = self.dim
        if dim <= 128 and 128 % dim == 0:
            pack = 128 // dim                  # pack k embeddings per 128-lane row
            ent, rel = self.entity_embeddings, self.relation_embeddings
        else:
            pack = 1
            pad = _round_up(dim, 128) - dim
            ent = jnp.pad(self.entity_embeddings, ((0, 0), (0, pad)))
            rel = jnp.pad(self.relation_embeddings, ((0, 0), (0, pad)))
        # bf16 kernel-side copies: halves HBM bytes; math stays f32 in-kernel.
        self._stream_tables = (ent.astype(jnp.bfloat16),
                               rel.astype(jnp.bfloat16), pack)

    def _distances_streaming(self, h_idx, r_idx, t_idx, n):
        self._ensure_stream_tables()
        ent, rel, pack = self._stream_tables
        row_w = ent.shape[1]
        w = pack * row_w                       # packed-row width (multiple of 128)
        npk = -(-n // pack)                    # packed rows needed
        tile_r = _choose_row_tile(npk, bytes_per_row=3 * 2 * w * 2,
                                  budget_bytes=24 << 20, granule=16)
        npk_pad = _round_up(npk, tile_r)
        n_idx = npk_pad * pack
        if n_idx != n:
            pad = (0, n_idx - n)
            h_idx = jnp.pad(h_idx, pad)
            r_idx = jnp.pad(r_idx, pad)
            t_idx = jnp.pad(t_idx, pad)
        # TODO(synk): for HBM-sized tables, fuse this gather into the kernel too
        # (scalar-prefetch indices + pl.ANY table + double-buffered per-row
        # pltpu.make_async_copy gather) instead of the XLA take below.
        h = jnp.take(ent, h_idx, axis=0).reshape(npk_pad, w)
        r = jnp.take(rel, r_idx, axis=0).reshape(npk_pad, w)
        t = jnp.take(ent, t_idx, axis=0).reshape(npk_pad, w)
        out = _transe_stream_pallas(h, r, t, self.norm, pack, tile_r)
        return out.reshape(-1)[:n]

    def forward(self,
                positive_head_batch, positive_relation_batch, positive_tail_batch,
                negative_head_batch, negative_relation_batch, negative_tail_batch):
        b = positive_head_batch.shape[0]
        n = 2 * b                              # rows 0..B-1 pos, B..2B-1 neg
        h_idx = jnp.concatenate([positive_head_batch, negative_head_batch]).astype(jnp.int32)
        r_idx = jnp.concatenate([positive_relation_batch, negative_relation_batch]).astype(jnp.int32)
        t_idx = jnp.concatenate([positive_tail_batch, negative_tail_batch]).astype(jnp.int32)
        if self._use_fused:
            dists = self._distances_fused(h_idx, r_idx, t_idx, n)
        else:
            dists = self._distances_streaming(h_idx, r_idx, t_idx, n)
        return dists.reshape(2, b)             # row 0 = positive, row 1 = negative

    # TODO(synk): validate_and_test() (all-candidate ranking) not ported; only
    # the forward() pass is implemented here.


# ----------------------------------- main -------------------------------------

def _reference_losses(model, ph, pr, pt, nh, nr, nt):
    def dist(hi, ri, ti):
        h = model.entity_embeddings[hi]
        r = model.relation_embeddings[ri]
        t = model.entity_embeddings[ti]
        d = h + r - t
        if model.norm == 1:
            return jnp.sum(jnp.abs(d), axis=1)
        if model.norm == 2:
            return jnp.sqrt(jnp.sum(d * d, axis=1))
        p = float(model.norm)
        return jnp.sum(jnp.abs(d) ** p, axis=1) ** (1.0 / p)
    return jnp.stack([dist(ph, pr, pt), dist(nh, nr, nt)], axis=0)


if __name__ == "__main__":
    num_entities, num_relations = 64, 16
    dim = 32
    margin, norm = 1.0, 2
    batch = 64

    model = TransE(num_entities, num_relations, dim, dim, margin, norm,
                   key=jax.random.PRNGKey(0))

    ks = jax.random.split(jax.random.PRNGKey(0), 6)
    pos_h = jax.random.randint(ks[0], (batch,), 0, num_entities, dtype=jnp.int32)
    pos_r = jax.random.randint(ks[1], (batch,), 0, num_relations, dtype=jnp.int32)
    pos_t = jax.random.randint(ks[2], (batch,), 0, num_entities, dtype=jnp.int32)
    neg_h = jax.random.randint(ks[3], (batch,), 0, num_entities, dtype=jnp.int32)
    neg_r = jax.random.randint(ks[4], (batch,), 0, num_relations, dtype=jnp.int32)
    neg_t = jax.random.randint(ks[5], (batch,), 0, num_entities, dtype=jnp.int32)

    # Fused path (VMEM-resident tables + in-kernel gather) — L2 norm.
    losses = jax.block_until_ready(
        model.forward(pos_h, pos_r, pos_t, neg_h, neg_r, neg_t))
    ref = _reference_losses(model, pos_h, pos_r, pos_t, neg_h, neg_r, neg_t)
    assert losses.shape == (2, batch)
    assert jnp.allclose(losses, ref, atol=1e-5, rtol=1e-5), "fused L2 mismatch"

    # Same fused kernel, L1-norm branch.
    model.norm = 1
    losses_l1 = jax.block_until_ready(
        model.forward(pos_h, pos_r, pos_t, neg_h, neg_r, neg_t))
    ref_l1 = _reference_losses(model, pos_h, pos_r, pos_t, neg_h, neg_r, neg_t)
    assert jnp.allclose(losses_l1, ref_l1, atol=1e-5, rtol=1e-5), "fused L1 mismatch"
    model.norm = norm

    # Streaming fallback (bf16 packed-lane tiles, MXU segmented reduce), as
    # used when the embedding tables don't fit in VMEM.
    h_idx = jnp.concatenate([pos_h, neg_h]).astype(jnp.int32)
    r_idx = jnp.concatenate([pos_r, neg_r]).astype(jnp.int32)
    t_idx = jnp.concatenate([pos_t, neg_t]).astype(jnp.int32)
    d_stream = jax.block_until_ready(
        model._distances_streaming(h_idx, r_idx, t_idx, 2 * batch))
    assert jnp.allclose(d_stream.reshape(2, batch), ref, atol=3e-2, rtol=3e-2), \
        "streaming mismatch"

    print("KERNEL_OK")
</pallas_src>

<mosaic_0001>
module attributes {stable_mosaic.version = 11 : i64} {
  func.func @_transe_fused_kernel(%arg0: i32, %arg1: memref<128xi32, #tpu.memory_space<smem>>, %arg2: memref<128xi32, #tpu.memory_space<smem>>, %arg3: memref<128xi32, #tpu.memory_space<smem>>, %arg4: memref<64x32xf32, #tpu.memory_space<vmem>>, %arg5: memref<16x32xf32, #tpu.memory_space<vmem>>, %arg6: memref<64x1xf32, #tpu.memory_space<vmem>>, %arg7: memref<64x32xf32, #tpu.memory_space<vmem>>) attributes {dimension_semantics = [#tpu.dimension_semantics<parallel>], iteration_bounds = array<i64: 2>, scalar_prefetch = 3 : i64, scratch_operands = 1 : i64, tpu.core_type = #tpu.core_type<tc>, window_params = [{pipeline_mode = #tpu.pipeline_mode<synchronous>, transform_indices = @transform_0, window_bounds = array<i64: 64, 32>}, {pipeline_mode = #tpu.pipeline_mode<synchronous>, transform_indices = @transform_1, window_bounds = array<i64: 16, 32>}, {transform_indices = @transform_2, window_bounds = array<i64: 64, 1>}]} {
    %c64_i32 = arith.constant 64 : i32
    %0 = arith.muli %arg0, %c64_i32 : i32
    %c0_i32 = arith.constant 0 : i32
    %c64_i32_0 = arith.constant 64 : i32
    %1 = arith.addi %c0_i32, %c64_i32_0 : i32
    %c1_i32 = arith.constant 1 : i32
    scf.for %arg8 = %c0_i32 to %1 step %c1_i32  : i32 {
      %8 = arith.addi %0, %arg8 : i32
      %9 = arith.index_cast %8 : i32 to index
      %10 = memref.load %arg1[%9] : memref<128xi32, #tpu.memory_space<smem>>
      %11 = arith.addi %0, %arg8 : i32
      %12 = arith.index_cast %11 : i32 to index
      %13 = memref.load %arg2[%12] : memref<128xi32, #tpu.memory_space<smem>>
      %14 = arith.addi %0, %arg8 : i32
      %15 = arith.index_cast %14 : i32 to index
      %16 = memref.load %arg3[%15] : memref<128xi32, #tpu.memory_space<smem>>
      %17 = arith.index_cast %10 : i32 to index
      %c0_5 = arith.constant 0 : index
      %18 = vector.load %arg4[%17, %c0_5] : memref<64x32xf32, #tpu.memory_space<vmem>>, vector<1x32xf32>
      %19 = arith.index_cast %13 : i32 to index
      %c0_6 = arith.constant 0 : index
      %20 = vector.load %arg5[%19, %c0_6] : memref<16x32xf32, #tpu.memory_space<vmem>>, vector<1x32xf32>
      %21 = arith.addf %18, %20 : vector<1x32xf32>
      %22 = arith.index_cast %16 : i32 to index
      %c0_7 = arith.constant 0 : index
      %23 = vector.load %arg4[%22, %c0_7] : memref<64x32xf32, #tpu.memory_space<vmem>>, vector<1x32xf32>
      %24 = arith.subf %21, %23 : vector<1x32xf32>
      %25 = arith.index_cast %arg8 : i32 to index
      %c0_8 = arith.constant 0 : index
      %26 = vector.load %arg7[%25, %c0_8] : memref<64x32xf32, #tpu.memory_space<vmem>>, vector<1x32xf32>
      tpu.vector_store %arg7[%25, %c0_8], %24 {strides = array<i32>} : memref<64x32xf32, #tpu.memory_space<vmem>>, vector<1x32xf32>,
    }
    %c64_i32_1 = arith.constant 64 : i32
    %c0 = arith.constant 0 : index
    %c0_2 = arith.constant 0 : index
    %2 = vector.load %arg7[%c0, %c0_2] : memref<64x32xf32, #tpu.memory_space<vmem>>, vector<64x32xf32>
    %3 = arith.mulf %2, %2 : vector<64x32xf32>
    %cst = arith.constant dense<0.000000e+00> : vector<64xf32>
    %4 = vector.multi_reduction <add>, %3, %cst [1] : vector<64x32xf32> to vector<64xf32>
    %5 = vector.shape_cast %4 : vector<64xf32> to vector<64x1xf32>
    %6 = math.sqrt %5 : vector<64x1xf32>
    %c0_3 = arith.constant 0 : index
    %c0_4 = arith.constant 0 : index
    %7 = vector.load %arg6[%c0_3, %c0_4] : memref<64x1xf32, #tpu.memory_space<vmem>>, vector<64x1xf32>
    tpu.vector_store %arg6[%c0_3, %c0_4], %6 {strides = array<i32>} : memref<64x1xf32, #tpu.memory_space<vmem>>, vector<64x1xf32>,
    return
  }
  func.func @transform_0(%arg0: i32, %arg1: memref<128xi32, #tpu.memory_space<smem>>, %arg2: memref<128xi32, #tpu.memory_space<smem>>, %arg3: memref<128xi32, #tpu.memory_space<smem>>) -> (i32, i32) {
    %c0_i32 = arith.constant 0 : i32
    %c0_i32_0 = arith.constant 0 : i32
    %c0_i32_1 = arith.constant 0 : i32
    return %c0_i32, %c0_i32_0 : i32, i32
  }
  func.func @transform_1(%arg0: i32, %arg1: memref<128xi32, #tpu.memory_space<smem>>, %arg2: memref<128xi32, #tpu.memory_space<smem>>, %arg3: memref<128xi32, #tpu.memory_space<smem>>) -> (i32, i32) {
    %c0_i32 = arith.constant 0 : i32
    %c0_i32_0 = arith.constant 0 : i32
    %c0_i32_1 = arith.constant 0 : i32
    return %c0_i32, %c0_i32_0 : i32, i32
  }
  func.func @transform_2(%arg0: i32, %arg1: memref<128xi32, #tpu.memory_space<smem>>, %arg2: memref<128xi32, #tpu.memory_space<smem>>, %arg3: memref<128xi32, #tpu.memory_space<smem>>) -> (i32, i32) {
    %c0_i32 = arith.constant 0 : i32
    %c0_i32_0 = arith.constant 0 : i32
    return %arg0, %c0_i32 : i32, i32
  }
}

</mosaic_0001>

<llo_original>
// kernel: tpu_custom_call.1
$region0: #{tpu_custom_call.1}
  #allocation0 [shape = 'u32[]', space=smem, size = 0x4, offset = 0x4, fixed_abs, tag = 'smem constant byte address 0x4 - core index']
  #allocation1 [shape = 'u32[144,128]{1,0:T(1,128)}', space=vmem, size = 0x12000, scoped, tag = 'internal scratch']
  #allocation2 [shape = 'f32[64,32]{1,0:T(8,128)}', space=vmem, size = 0x8000, scoped, tag = 'scratch operand']
  #allocation3 [shape = 's32[1]{0}', space=sflag, size = 0x4, scoped, tag = 'scoped memory for tpu_custom_call.1']
  #allocation4 [shape = 'u8[512]{0}', space=smem, size = 0x200, scoped, tag = 'prefetched SMEM operand 0']
  #allocation5 [shape = 'u8[512]{0}', space=smem, size = 0x200, scoped, tag = 'prefetched SMEM operand 1']
  #allocation6 [shape = 'u8[512]{0}', space=smem, size = 0x200, scoped, tag = 'prefetched SMEM operand 2']
  %s0 = inlined_call_operand.vmem [shape: s32[128], index: 0, kind: input, shape index: {}]
  %s1 = inlined_call_operand.vmem [shape: s32[128], index: 1, kind: input, shape index: {}]
  %s2 = inlined_call_operand.vmem [shape: s32[128], index: 2, kind: input, shape index: {}]
  %s3 = inlined_call_operand.vmem [shape: f32[64,32], index: 3, kind: input, shape index: {}]
  %s4 = inlined_call_operand.vmem [shape: f32[16,32], index: 4, kind: input, shape index: {}]
  %s5 = inlined_call_operand.vmem [shape: f32[128,1], index: 5, kind: output, shape index: {}]
  %s6 = sld [smem:[#allocation0]]
  $region48: #{tpu_custom_call.1} parent=0
    _
  %s8 = ssub.s32 1, %s6
  %s9 = scalar_select 0, %s8, %s6
  %s10 = sshll.u32 %s0, 4
  %s11 = int_to_ptr.vmem [resolvable:$true] %s10
  %13 = dma.vmem_to_smem %s11, 16, [#allocation4], [#allocation3]
  %s14 = sshll.u32 %s1, 4
  %s15 = int_to_ptr.vmem [resolvable:$true] %s14
  %17 = dma.vmem_to_smem %s15, 16, [#allocation5], [#allocation3]
  %s18 = sshll.u32 %s2, 4
  %s19 = int_to_ptr.vmem [resolvable:$true] %s18
  %21 = dma.vmem_to_smem %s19, 16, [#allocation6], [#allocation3]
  %22 = dma.done [#allocation3], 48
  %23 = sfence
  loop: start=0, step=1, limit=4
  $region2: #{tpu_custom_call.1} parent=0 // loop_pre_header
    _
  $region3: #{tpu_custom_call.1} parent=0 // loop_header
    %s25 = sphi 0, %s29
    %p26 = scmp.ge.s32.totalorder %s25, 4
    %s33 = sphi 0, %s33
    %s35 = sphi 0, %s33
    %s36 = sphi 0, %s35
    %s50 = sphi 0, %s36
    %s54 = sphi 0, %s54
    %s56 = sphi 0, %s54
    %s57 = sphi 0, %s56
    %s71 = sphi 0, %s57
    %s77 = sphi 0, %s79
    %s80 = sphi 0, %s77
    %s81 = sphi 0, %s80
    %s97 = sphi 0, %s81
  $region4: #{tpu_custom_call.1} parent=0 // loop_header_branch
    %28 = sbr.rel (%p26) target = $region8
  $region5: #{tpu_custom_call.1} parent=0 // loop_body
    %s30 = ssub.s32 %s25, 1
    %s31 = ssub.s32 %s25, 2
    %s32 = sadd.s32 %s25, 1
    %s34 = sadd.s32 %s33, 1
    %p37 = scmp.eq.s32.totalorder %s25, 1
    %p38 = scmp.ne.s32.totalorder %s33, %s35
    %p39 = scmp.eq.s32.totalorder %s25, 0
    %p40 = por %p38, %p39
    %p41 = scmp.ne.s32.totalorder %s33, %s35
    %p42 = scmp.eq.s32.totalorder %s30, 1
    %p43 = por %p41, %p42
    %p44 = scmp.ne.s32.totalorder %s35, %s36
    %p45 = scmp.eq.s32.totalorder %s30, 0
    %p46 = por %p44, %p45
    %p47 = scmp.ne.s32.totalorder %s35, %s36
    %p48 = scmp.eq.s32.totalorder %s31, 1
    %p49 = por %p47, %p48
    %p51 = scmp.ne.s32.totalorder %s36, %s50
    %p52 = scmp.eq.s32.totalorder %s31, 0
    %p53 = por %p51, %p52
    %s55 = sadd.s32 %s54, 1
    %p58 = scmp.eq.s32.totalorder %s25, 1
    %p59 = scmp.ne.s32.totalorder %s54, %s56
    %p60 = scmp.eq.s32.totalorder %s25, 0
    %p61 = por %p59, %p60
    %p62 = scmp.ne.s32.totalorder %s54, %s56
    %p63 = scmp.eq.s32.totalorder %s30, 1
    %p64 = por %p62, %p63
    %p65 = scmp.ne.s32.totalorder %s56, %s57
    %p66 = scmp.eq.s32.totalorder %s30, 0
    %p67 = por %p65, %p66
    %p68 = scmp.ne.s32.totalorder %s56, %s57
    %p69 = scmp.eq.s32.totalorder %s31, 1
    %p70 = por %p68, %p69
    %p72 = scmp.ne.s32.totalorder %s57, %s71
    %p73 = scmp.eq.s32.totalorder %s31, 0
    %p74 = por %p72, %p73
    %s75 = ssub.s32 %s25, %s32
    %p76 = scmp.eq.s32.totalorder %s75, 0
    %s78 = sadd.s32 %s77, 1
    %s79 = scalar_select %p76, %s77, %s78
    %p82 = pneg %p76
    %p83 = scmp.eq.s32.totalorder %s25, 1
    %p84 = por %p82, %p83
    %p85 = scmp.ne.s32.totalorder %s77, %s80
    %p86 = scmp.eq.s32.totalorder %s25, 0
    %p87 = por %p85, %p86
    %p88 = scmp.ne.s32.totalorder %s77, %s80
    %p89 = scmp.eq.s32.totalorder %s30, 1
    %p90 = por %p88, %p89
    %p91 = scmp.ne.s32.totalorder %s80, %s81
    %p92 = scmp.eq.s32.totalorder %s30, 0
    %p93 = por %p91, %p92
    %p94 = scmp.ne.s32.totalorder %s80, %s81
    %p95 = scmp.eq.s32.totalorder %s31, 1
    %p96 = por %p94, %p95
    %p98 = scmp.ne.s32.totalorder %s81, %s97
    %p99 = scmp.eq.s32.totalorder %s31, 0
    %p100 = por %p98, %p99
    %p101 = scmp.le.s32.totalorder 1, %s25
    %p102 = scmp.lt.s32.totalorder %s25, 3
    %p103 = pnand %p101, %p102
    %p104 = pneg %p103
    // Predicated region
    $region9: #{tpu_custom_call.1} parent=5 // pred_check
      _
    $region10: #{tpu_custom_call.1} parent=5 // pred_check_branch
      %106 = sbr.rel (%p103) target = $region12
    $region11: #{tpu_custom_call.1} parent=5 // pred_region
      %s107 = ssub.s32 %s25, 1
      // Predicated region
      $region13: #{tpu_custom_call.1} parent=11 // pred_check
        %p108 = pneg %p46
      $region14: #{tpu_custom_call.1} parent=11 // pred_check_branch
        %110 = sbr.rel (%p108) target = $region16
      $region15: #{tpu_custom_call.1} parent=11 // pred_region
        _
      $region16: #{tpu_custom_call.1} parent=11 // pred_fallthru
        _
      // Predicated region
      $region17: #{tpu_custom_call.1} parent=11 // pred_check
        %p111 = pneg %p67
      $region18: #{tpu_custom_call.1} parent=11 // pred_check_branch
        %113 = sbr.rel (%p111) target = $region20
      $region19: #{tpu_custom_call.1} parent=11 // pred_region
        _
      $region20: #{tpu_custom_call.1} parent=11 // pred_fallthru
        _
    $region12: #{tpu_custom_call.1} parent=5 // pred_fallthru
      _
    %p114 = scmp.lt.s32.totalorder %s25, 2
    // Predicated region
    $region21: #{tpu_custom_call.1} parent=5 // pred_check
      %p115 = pneg %p114
    $region22: #{tpu_custom_call.1} parent=5 // pred_check_branch
      %117 = sbr.rel (%p115) target = $region24
    $region23: #{tpu_custom_call.1} parent=5 // pred_region
      _
    $region24: #{tpu_custom_call.1} parent=5 // pred_fallthru
      _
    %p118 = scmp.le.s32.totalorder 1, %s25
    %p119 = scmp.lt.s32.totalorder %s25, 3
    %p120 = pnand %p118, %p119
    %p121 = pneg %p120
    // Predicated region
    $region25: #{tpu_custom_call.1} parent=5 // pred_check
      _
    $region26: #{tpu_custom_call.1} parent=5 // pred_check_branch
      %123 = sbr.rel (%p120) target = $region28
    $region27: #{tpu_custom_call.1} parent=5 // pred_region
      %s124 = ssub.s32 %s25, 1
      %p125 = pneg %p46
      %p126 = pneg %p43
      %p127 = pneg %p67
      %p128 = pneg %p64
      %p129 = pneg %p93
      %p130 = pneg %p90
      %s131 = smul.u32 8, %s30
      %p132 = scmp.lt.s32.totalorder %s131, 15
      %s133 = scalar_select %p132, %s131, 15
      %s134 = smul.addr %s133, 8
      %s135 = scalar_lea.vmem %s5, %s134
      %s136 = smul.u32 8, %s30
      %p137 = scmp.lt.s32.totalorder %s136, 15
      %s138 = scalar_select %p137, %s136, 15
      %s139 = smul.addr %s138, 8
      %s140 = scalar_lea.vmem %s5, %s139
      %s141 = smul.u32 8, %s30
      %s142 = smul.u32 %s30, 64
      loop: start=0, step=1, limit=64
      $region29: #{tpu_custom_call.1} parent=27 // loop_pre_header
        _
      $region30: #{tpu_custom_call.1} parent=27 // loop_header
        %s144 = sphi 0, %s148
        %p145 = scmp.ge.s32.totalorder %s144, 64
      $region31: #{tpu_custom_call.1} parent=27 // loop_header_branch
        %147 = sbr.rel (%p145) target = $region35
      $region32: #{tpu_custom_call.1} parent=27 // loop_body
        %s149 = sadd.s32 %s142, %s144
        %s150 = sld [smem:[#allocation4 + %s149]]
        %s151 = sld [smem:[#allocation5 + %s149]]
        %s152 = sld [smem:[#allocation6 + %s149]]
        %s153 = scalar_lea.vmem %s3, %s150
        %v154 = vld [vmem:[%s153] sm:$0x1]
        %s155 = scalar_lea.vmem %s4, %s151
        %v156 = vld [vmem:[%s155] sm:$0x1]
        %v157 = vadd.f32 %v154, %v156
        %s158 = scalar_lea.vmem %s3, %s152
        %v159 = vld [vmem:[%s158] sm:$0x1]
        %v160 = vsub.f32 %v157, %v159
        %s161 = scalar_lea.vmem [#allocation2], %s144
        %vm162 = vcmask 253952
        %163 = vst.msk [vmem:[%s161] sm:$0x1] %vm162, %v160
      $region33: #{tpu_custom_call.1} parent=27 // loop_footer
        %s148 = sadd.s32 1, %s144
      $region34: #{tpu_custom_call.1} parent=27 // loop_footer_branch
        %143 = sbr.rel target = $region30
      $region35: #{tpu_custom_call.1} parent=27 // loop_exit
        _
      %v164 = vld [vmem:[#allocation2] sm:$0xff]
      %v165 = vld [vmem:[#allocation2 + $0x8] sm:$0xff]
      %v166 = vld [vmem:[#allocation2 + $0x10] sm:$0xff]
      %v167 = vld [vmem:[#allocation2 + $0x18] sm:$0xff]
      %v168 = vld [vmem:[#allocation2 + $0x20] sm:$0xff]
      %v169 = vld [vmem:[#allocation2 + $0x28] sm:$0xff]
      %v170 = vld [vmem:[#allocation2 + $0x30] sm:$0xff]
      %v171 = vld [vmem:[#allocation2 + $0x38] sm:$0xff]
      %v172 = vmul.f32 %v164, %v164
      %v173 = vmul.f32 %v165, %v165
      %v174 = vmul.f32 %v166, %v166
      %v175 = vmul.f32 %v167, %v167
      %v176 = vmul.f32 %v168, %v168
      %v177 = vmul.f32 %v169, %v169
      %v178 = vmul.f32 %v170, %v170
      %v179 = vmul.f32 %v171, %v171
      %vm180 = vcmask 261120
      %v181 = vsel %vm180, %v172, 0.0
      %182 = vadd.xlane.f32.xlu0 %v181
      %v183 = vpop.xlane.xlu0 %182
      %v184 = vsel %vm180, %v173, 0.0
      %185 = vadd.xlane.f32.xlu0 %v184
      %v186 = vpop.xlane.xlu0 %185
      %v187 = vsel %vm180, %v174, 0.0
      %188 = vadd.xlane.f32.xlu0 %v187
      %v189 = vpop.xlane.xlu0 %188
      %v190 = vsel %vm180, %v175, 0.0
      %191 = vadd.xlane.f32.xlu0 %v190
      %v192 = vpop.xlane.xlu0 %191
      %v193 = vsel %vm180, %v176, 0.0
      %194 = vadd.xlane.f32.xlu0 %v193
      %v195 = vpop.xlane.xlu0 %194
      %v196 = vsel %vm180, %v177, 0.0
      %197 = vadd.xlane.f32.xlu0 %v196
      %v198 = vpop.xlane.xlu0 %197
      %v199 = vsel %vm180, %v178, 0.0
      %200 = vadd.xlane.f32.xlu0 %v199
      %v201 = vpop.xlane.xlu0 %200
      %v202 = vsel %vm180, %v179, 0.0
      %203 = vadd.xlane.f32.xlu0 %v202
      %v204 = vpop.xlane.xlu0 %203
      %v205 = vrsqrt.pop %v183
      %v206 = vmul.f32 %v183, %v205
      %vm207 = vcmp.eq.f32.partialorder %v183, inf
      %v208 = vsel %vm207, %v183, %v206
      %vm209 = vcmp.eq.f32.partialorder %v183, 0.0
      %v210 = vand.u32 %v183, 2147483648
      %v211 = vsel %vm209, %v210, %v208
      %v212 = vrsqrt.pop %v186
      %v213 = vmul.f32 %v186, %v212
      %vm214 = vcmp.eq.f32.partialorder %v186, inf
      %v215 = vsel %vm214, %v186, %v213
      %vm216 = vcmp.eq.f32.partialorder %v186, 0.0
      %v217 = vand.u32 %v186, 2147483648
      %v218 = vsel %vm216, %v217, %v215
      %v219 = vrsqrt.pop %v189
      %v220 = vmul.f32 %v189, %v219
      %vm221 = vcmp.eq.f32.partialorder %v189, inf
      %v222 = vsel %vm221, %v189, %v220
      %vm223 = vcmp.eq.f32.partialorder %v189, 0.0
      %v224 = vand.u32 %v189, 2147483648
      %v225 = vsel %vm223, %v224, %v222
      %v226 = vrsqrt.pop %v192
      %v227 = vmul.f32 %v192, %v226
      %vm228 = vcmp.eq.f32.partialorder %v192, inf
      %v229 = vsel %vm228, %v192, %v227
      %vm230 = vcmp.eq.f32.partialorder %v192, 0.0
      %v231 = vand.u32 %v192, 2147483648
      %v232 = vsel %vm230, %v231, %v229
      %v233 = vrsqrt.pop %v195
      %v234 = vmul.f32 %v195, %v233
      %vm235 = vcmp.eq.f32.partialorder %v195, inf
      %v236 = vsel %vm235, %v195, %v234
      %vm237 = vcmp.eq.f32.partialorder %v195, 0.0
      %v238 = vand.u32 %v195, 2147483648
      %v239 = vsel %vm237, %v238, %v236
      %v240 = vrsqrt.pop %v198
      %v241 = vmul.f32 %v198, %v240
      %vm242 = vcmp.eq.f32.partialorder %v198, inf
      %v243 = vsel %vm242, %v198, %v241
      %vm244 = vcmp.eq.f32.partialorder %v198, 0.0
      %v245 = vand.u32 %v198, 2147483648
      %v246 = vsel %vm244, %v245, %v243
      %v247 = vrsqrt.pop %v201
      %v248 = vmul.f32 %v201, %v247
      %vm249 = vcmp.eq.f32.partialorder %v201, inf
      %v250 = vsel %vm249, %v201, %v248
      %vm251 = vcmp.eq.f32.partialorder %v201, 0.0
      %v252 = vand.u32 %v201, 2147483648
      %v253 = vsel %vm251, %v252, %v250
      %v254 = vrsqrt.pop %v204
      %v255 = vmul.f32 %v204, %v254
      %vm256 = vcmp.eq.f32.partialorder %v204, inf
      %v257 = vsel %vm256, %v204, %v255
      %vm258 = vcmp.eq.f32.partialorder %v204, 0.0
      %v259 = vand.u32 %v204, 2147483648
      %v260 = vsel %vm258, %v259, %v257
      %vm261 = vcmask 7168
      %262 = vst.msk [vmem:[%s140] sm:$0xff] %vm261, %v211
      %263 = vst.msk [vmem:[%s140 + $0x8] sm:$0xff] %vm261, %v218
      %264 = vst.msk [vmem:[%s140 + $0x10] sm:$0xff] %vm261, %v225
      %265 = vst.msk [vmem:[%s140 + $0x18] sm:$0xff] %vm261, %v232
      %266 = vst.msk [vmem:[%s140 + $0x20] sm:$0xff] %vm261, %v239
      %267 = vst.msk [vmem:[%s140 + $0x28] sm:$0xff] %vm261, %v246
      %268 = vst.msk [vmem:[%s140 + $0x30] sm:$0xff] %vm261, %v253
      %269 = vst.msk [vmem:[%s140 + $0x38] sm:$0xff] %vm261, %v260
      %s270 = smul.u32 8, %s30
      %p271 = scmp.lt.s32.totalorder %s270, 15
      %s272 = scalar_select %p271, %s270, 15
      %s273 = smul.addr %s272, 8
      %s274 = scalar_lea.vmem %s5, %s273
      // Predicated region
      $region36: #{tpu_custom_call.1} parent=27 // pred_check
        %p275 = pneg %p90
      $region37: #{tpu_custom_call.1} parent=27 // pred_check_branch
        %277 = sbr.rel (%p275) target = $region39
      $region38: #{tpu_custom_call.1} parent=27 // pred_region
        %s278 = smul.u32 8, %s30
      $region39: #{tpu_custom_call.1} parent=27 // pred_fallthru
        _
    $region28: #{tpu_custom_call.1} parent=5 // pred_fallthru
      _
    %p279 = scmp.le.s32.totalorder 2, %s25
    // Predicated region
    $region40: #{tpu_custom_call.1} parent=5 // pred_check
      %p280 = pneg %p279
    $region41: #{tpu_custom_call.1} parent=5 // pred_check_branch
      %282 = sbr.rel (%p280) target = $region43
    $region42: #{tpu_custom_call.1} parent=5 // pred_region
      %s283 = ssub.s32 %s25, 2
      // Predicated region
      $region44: #{tpu_custom_call.1} parent=42 // pred_check
        %p284 = pneg %p96
      $region45: #{tpu_custom_call.1} parent=42 // pred_check_branch
        %286 = sbr.rel (%p284) target = $region47
      $region46: #{tpu_custom_call.1} parent=42 // pred_region
        %s287 = smul.u32 8, %s31
        %p288 = scmp.lt.s32.totalorder %s287, 15
        %s289 = scalar_select %p288, %s287, 15
        %s290 = smul.addr %s289, 8
        %s291 = scalar_lea.vmem %s5, %s290
      $region47: #{tpu_custom_call.1} parent=42 // pred_fallthru
        _
    $region43: #{tpu_custom_call.1} parent=5 // pred_fallthru
      _
  $region6: #{tpu_custom_call.1} parent=0 // loop_footer
    %s29 = sadd.s32 1, %s25
  $region7: #{tpu_custom_call.1} parent=0 // loop_footer_branch
    %24 = sbr.rel target = $region3
  $region8: #{tpu_custom_call.1} parent=0 // loop_exit
    _

</llo_original>
